<compile_context>
chip_gen: v5e
topology: v5e:2x2
jax: 0.10.0
libtpu: 0.0.40
codegen_flags: <defaults>
</compile_context>

<pallas_src>
import jax
import jax.numpy as jnp
from jax.experimental import pallas as pl
from jax.experimental.pallas import tpu as pltpu


def _round_up(n, m):
    return ((n + m - 1) // m) * m


def _default_tanh_dtype():
    """bf16 tanh only where the EUP has a native bf16 path (v6e / v7x)."""
    try:
        kind = jax.devices()[0].device_kind.lower()
    except Exception:
        kind = ""
    if ("v6" in kind) or ("v7" in kind):
        return jnp.bfloat16
    return jnp.float32


def make_mlp_kernel(n_layers, tanh_dtype):
    """Build the fused-MLP kernel body.

    refs = (x_ref, w0_ref, b0_ref, w1_ref, b1_ref, ..., out_ref)
      x: f32 [bb, d_in] (unpadded), cast to bf16 in-kernel.
      W_i: bf16, lane-padded output dim; b_i: f32 [1, dout_p].
      MXU dots accumulate in f32; tanh in `tanh_dtype` (bf16 on v6e/v7x, f32 on v5e).
    """
    def mlp_kernel(*refs):
        x_ref = refs[0]
        out_ref = refs[-1]
        param_refs = refs[1:-1]

        h = x_ref[...].astype(jnp.bfloat16)          # bf16 [bb, d_in]
        for i in range(n_layers):
            w = param_refs[2 * i][...]               # bf16 [din(_p), dout_p]
            b = param_refs[2 * i + 1][...]           # f32  [1, dout_p]
            acc = jnp.dot(h, w, preferred_element_type=jnp.float32) + b
            if i < n_layers - 1:
                if tanh_dtype == jnp.float32:
                    # v5e path: f32 tanh (no bf16 EUP), cast only for the next dot.
                    h = jnp.tanh(acc).astype(jnp.bfloat16)
                else:
                    # v6e/v7x path: fuse the cast the next dot needs with the tanh.
                    h = jnp.tanh(acc.astype(jnp.bfloat16))
            else:
                out_ref[...] = acc.astype(out_ref.dtype)
    return mlp_kernel


def prepare_params(params, layer_sizes, *, lane=128, weight_dtype=jnp.bfloat16):
    """Zero-pad hidden/output feature dims to a multiple of `lane`, cast weights to bf16.

    params: list of (W, b) with W: (in, out) f32 (pre-transposed from PyTorch's
    (out, in) layout) and b: (out,) f32.  The input dim of the FIRST layer is left
    unpadded (x is passed unpadded).  Returns (flat (w0,b0,w1,b1,...), padded dims).
    """
    dims_p = [layer_sizes[0]] + [_round_up(d, lane) for d in layer_sizes[1:]]
    flat = []
    for i, (w, b) in enumerate(params):
        din, dout = w.shape
        w_p = jnp.zeros((dims_p[i], dims_p[i + 1]), weight_dtype)
        w_p = w_p.at[:din, :dout].set(w.astype(weight_dtype))
        b_p = jnp.zeros((1, dims_p[i + 1]), jnp.float32)
        b_p = b_p.at[:, :dout].set(b.reshape(1, -1).astype(jnp.float32))
        flat += [w_p, b_p]
    return tuple(flat), dims_p


def dynamic_nn_forward(x, params, layer_sizes, *, batch_block=1024, lane=128,
                       out_dtype=jnp.float32, tanh_dtype=None):
    """Run the whole DynamicNN forward pass in one Pallas kernel, tiling the batch."""
    B, d_in = x.shape
    assert d_in == layer_sizes[0], "input width must match layer_sizes[0]"
    if tanh_dtype is None:
        tanh_dtype = _default_tanh_dtype()

    flat_params, dims_p = prepare_params(params, layer_sizes, lane=lane)
    d_out_p = dims_p[-1]
    n_layers = len(flat_params) // 2

    # Batch tile: large (amortize ~0.35us/step overhead) but guarantee >= 2 grid
    # steps when B allows so both v7x TensorCores get work. 8-row sublane aligned.
    bb = min(_round_up(batch_block, 8), _round_up(pl.cdiv(B, 2), 8))
    bb = max(bb, 8)
    grid = (pl.cdiv(B, bb),)

    # x stays unpadded: last block dim == full array dim, so the (8,128) rule holds.
    x_spec = pl.BlockSpec((bb, d_in), lambda i: (i, 0))
    # Constant index_map => each weight/bias is DMA'd once and stays VMEM-resident.
    param_specs = [pl.BlockSpec(p.shape, lambda i: (0, 0)) for p in flat_params]
    out_spec = pl.BlockSpec((bb, d_out_p), lambda i: (i, 0))

    # Explicit scoped-VMEM limit: rough per-block footprint x2 headroom, floored at
    # 32 MiB (above v5e's 16 MiB default), capped at 64 MiB (v7x physical).
    params_bytes = sum(int(p.size) * p.dtype.itemsize for p in flat_params)
    max_dp = max(dims_p[1:])
    out_itemsize = jnp.dtype(out_dtype).itemsize
    est = (2 * bb * d_in * x.dtype.itemsize        # double-buffered x blocks
           + 2 * bb * d_out_p * out_itemsize       # double-buffered out blocks
           + params_bytes
           + 4 * bb * max_dp * 4)                  # live f32/bf16 intermediates
    vmem_limit = min(max(2 * est, 32 * 1024 * 1024), 64 * 1024 * 1024)

    out_padded = pl.pallas_call(
        make_mlp_kernel(n_layers, tanh_dtype),
        out_shape=jax.ShapeDtypeStruct((B, d_out_p), out_dtype),
        grid_spec=pltpu.PrefetchScalarGridSpec(
            num_scalar_prefetch=0,
            grid=grid,
            in_specs=[x_spec] + param_specs,
            out_specs=out_spec,
        ),
        compiler_params=pltpu.CompilerParams(
            dimension_semantics=("parallel",),   # shards batch tiles across TCs on v7x
            vmem_limit_bytes=int(vmem_limit),
        ),
    )(x, *flat_params)

    # Drop the lane padding on the output features.
    return out_padded[:, :layer_sizes[-1]]


def init_params(key, layer_sizes):
    """Deterministic init mimicking PyTorch nn.Linear default (uniform +/- 1/sqrt(fan_in)).
    Weights are produced directly in (in, out) layout; biases as (out,)."""
    n_layers = len(layer_sizes) - 1
    keys = jax.random.split(key, 2 * n_layers)
    params = []
    for i in range(n_layers):
        fan_in, fan_out = layer_sizes[i], layer_sizes[i + 1]
        bound = 1.0 / (fan_in ** 0.5)
        w = jax.random.uniform(keys[2 * i], (fan_in, fan_out), jnp.float32, -bound, bound)
        b = jax.random.uniform(keys[2 * i + 1], (fan_out,), jnp.float32, -bound, bound)
        params.append((w, b))
    return params


def dynamic_nn_reference_f32(x, params):
    """Pure f32 JAX reference matching DynamicNN.forward (no softmax)."""
    h = x
    n = len(params)
    for i, (w, b) in enumerate(params):
        h = h @ w + b
        if i < n - 1:
            h = jnp.tanh(h)
    return h


def dynamic_nn_reference_kernel_path(x, params, layer_sizes, *, lane=128,
                                     tanh_dtype=jnp.bfloat16):
    """Reference mirroring the kernel numerics (bf16 dots, f32 acc, tanh in tanh_dtype)."""
    flat, _ = prepare_params(params, layer_sizes, lane=lane)
    h = x.astype(jnp.bfloat16)
    n = len(flat) // 2
    out = None
    for i in range(n):
        w, b = flat[2 * i], flat[2 * i + 1]
        acc = jnp.dot(h, w, preferred_element_type=jnp.float32) + b
        if i < n - 1:
            if tanh_dtype == jnp.float32:
                h = jnp.tanh(acc).astype(jnp.bfloat16)
            else:
                h = jnp.tanh(acc.astype(jnp.bfloat16))
        else:
            out = acc
    return out[:, :layer_sizes[-1]]


if __name__ == "__main__":
    # Small demo shapes consistent with an MLP classifier head.
    layer_sizes = [32, 200, 500, 200, 50, 10]
    batch = 8

    key = jax.random.PRNGKey(0)
    k_x, k_p = jax.random.split(key)
    x = jax.random.normal(k_x, (batch, layer_sizes[0]), jnp.float32)
    params = init_params(k_p, layer_sizes)

    tanh_dtype = _default_tanh_dtype()

    out = dynamic_nn_forward(x, params, layer_sizes, tanh_dtype=tanh_dtype)
    out = jax.block_until_ready(out)
    assert out.shape == (batch, layer_sizes[-1])

    # Check vs a reference that mirrors the kernel's bf16/f32 numerics path.
    ref_k = dynamic_nn_reference_kernel_path(x, params, layer_sizes, tanh_dtype=tanh_dtype)
    assert jnp.allclose(out.astype(jnp.float32), ref_k, atol=2e-2, rtol=2e-2), \
        "mismatch vs kernel-path reference"

    # Loose check vs the pure-f32 reference (difference is bf16 weight/act quantization).
    ref_f32 = dynamic_nn_reference_f32(x, params)
    assert jnp.allclose(out.astype(jnp.float32), ref_f32, atol=7e-2, rtol=7e-2), \
        "mismatch vs f32 reference"

    print("KERNEL_OK")
</pallas_src>

<mosaic_0001>
module attributes {stable_mosaic.version = 11 : i64} {
  func.func @mlp_kernel(%arg0: i32, %arg1: memref<8x32xf32, #tpu.memory_space<vmem>>, %arg2: memref<32x256xbf16, #tpu.memory_space<vmem>>, %arg3: memref<1x256xf32, #tpu.memory_space<vmem>>, %arg4: memref<256x512xbf16, #tpu.memory_space<vmem>>, %arg5: memref<1x512xf32, #tpu.memory_space<vmem>>, %arg6: memref<512x256xbf16, #tpu.memory_space<vmem>>, %arg7: memref<1x256xf32, #tpu.memory_space<vmem>>, %arg8: memref<256x128xbf16, #tpu.memory_space<vmem>>, %arg9: memref<1x128xf32, #tpu.memory_space<vmem>>, %arg10: memref<128x128xbf16, #tpu.memory_space<vmem>>, %arg11: memref<1x128xf32, #tpu.memory_space<vmem>>, %arg12: memref<8x128xf32, #tpu.memory_space<vmem>>) attributes {dimension_semantics = [#tpu.dimension_semantics<parallel>], iteration_bounds = array<i64: 1>, scalar_prefetch = 0 : i64, scratch_operands = 0 : i64, tpu.core_type = #tpu.core_type<tc>, window_params = [{transform_indices = @transform_0, window_bounds = array<i64: 8, 32>}, {pipeline_mode = #tpu.pipeline_mode<synchronous>, transform_indices = @transform_1, window_bounds = array<i64: 32, 256>}, {pipeline_mode = #tpu.pipeline_mode<synchronous>, transform_indices = @transform_2, window_bounds = array<i64: 1, 256>}, {pipeline_mode = #tpu.pipeline_mode<synchronous>, transform_indices = @transform_3, window_bounds = array<i64: 256, 512>}, {pipeline_mode = #tpu.pipeline_mode<synchronous>, transform_indices = @transform_4, window_bounds = array<i64: 1, 512>}, {pipeline_mode = #tpu.pipeline_mode<synchronous>, transform_indices = @transform_5, window_bounds = array<i64: 512, 256>}, {pipeline_mode = #tpu.pipeline_mode<synchronous>, transform_indices = @transform_6, window_bounds = array<i64: 1, 256>}, {pipeline_mode = #tpu.pipeline_mode<synchronous>, transform_indices = @transform_7, window_bounds = array<i64: 256, 128>}, {pipeline_mode = #tpu.pipeline_mode<synchronous>, transform_indices = @transform_8, window_bounds = array<i64: 1, 128>}, {pipeline_mode = #tpu.pipeline_mode<synchronous>, transform_indices = @transform_9, window_bounds = array<i64: 128, 128>}, {pipeline_mode = #tpu.pipeline_mode<synchronous>, transform_indices = @transform_10, window_bounds = array<i64: 1, 128>}, {transform_indices = @transform_11, window_bounds = array<i64: 8, 128>}]} {
    %c0 = arith.constant 0 : index
    %c0_0 = arith.constant 0 : index
    %0 = vector.load %arg1[%c0, %c0_0] : memref<8x32xf32, #tpu.memory_space<vmem>>, vector<8x32xf32>
    %1 = arith.truncf %0 : vector<8x32xf32> to vector<8x32xbf16>
    %c0_1 = arith.constant 0 : index
    %c0_2 = arith.constant 0 : index
    %2 = vector.load %arg2[%c0_1, %c0_2] : memref<32x256xbf16, #tpu.memory_space<vmem>>, vector<32x256xbf16>
    %c0_3 = arith.constant 0 : index
    %c0_4 = arith.constant 0 : index
    %3 = vector.load %arg3[%c0_3, %c0_4] : memref<1x256xf32, #tpu.memory_space<vmem>>, vector<1x256xf32>
    %cst = arith.constant dense<0.000000e+00> : vector<8x256xf32>
    %4 = tpu.matmul %1, %2, %cst {dimension_numbers = #tpu.dot_dimension_numbers<[1], [0], [0], [1], [0, 0, 1, 1], [], []>} : vector<8x32xbf16>, vector<32x256xbf16>, vector<8x256xf32> -> vector<8x256xf32>
    %5 = vector.broadcast %3 : vector<1x256xf32> to vector<8x256xf32>
    %6 = arith.addf %4, %5 : vector<8x256xf32>
    %7 = math.tanh %6 : vector<8x256xf32>
    %8 = arith.truncf %7 : vector<8x256xf32> to vector<8x256xbf16>
    %c0_5 = arith.constant 0 : index
    %c0_6 = arith.constant 0 : index
    %9 = vector.load %arg4[%c0_5, %c0_6] : memref<256x512xbf16, #tpu.memory_space<vmem>>, vector<256x512xbf16>
    %c0_7 = arith.constant 0 : index
    %c0_8 = arith.constant 0 : index
    %10 = vector.load %arg5[%c0_7, %c0_8] : memref<1x512xf32, #tpu.memory_space<vmem>>, vector<1x512xf32>
    %cst_9 = arith.constant dense<0.000000e+00> : vector<8x512xf32>
    %11 = tpu.matmul %8, %9, %cst_9 {dimension_numbers = #tpu.dot_dimension_numbers<[1], [0], [0], [1], [0, 0, 1, 1], [], []>} : vector<8x256xbf16>, vector<256x512xbf16>, vector<8x512xf32> -> vector<8x512xf32>
    %12 = vector.broadcast %10 : vector<1x512xf32> to vector<8x512xf32>
    %13 = arith.addf %11, %12 : vector<8x512xf32>
    %14 = math.tanh %13 : vector<8x512xf32>
    %15 = arith.truncf %14 : vector<8x512xf32> to vector<8x512xbf16>
    %c0_10 = arith.constant 0 : index
    %c0_11 = arith.constant 0 : index
    %16 = vector.load %arg6[%c0_10, %c0_11] : memref<512x256xbf16, #tpu.memory_space<vmem>>, vector<512x256xbf16>
    %c0_12 = arith.constant 0 : index
    %c0_13 = arith.constant 0 : index
    %17 = vector.load %arg7[%c0_12, %c0_13] : memref<1x256xf32, #tpu.memory_space<vmem>>, vector<1x256xf32>
    %cst_14 = arith.constant dense<0.000000e+00> : vector<8x256xf32>
    %18 = tpu.matmul %15, %16, %cst_14 {dimension_numbers = #tpu.dot_dimension_numbers<[1], [0], [0], [1], [0, 0, 1, 1], [], []>} : vector<8x512xbf16>, vector<512x256xbf16>, vector<8x256xf32> -> vector<8x256xf32>
    %19 = vector.broadcast %17 : vector<1x256xf32> to vector<8x256xf32>
    %20 = arith.addf %18, %19 : vector<8x256xf32>
    %21 = math.tanh %20 : vector<8x256xf32>
    %22 = arith.truncf %21 : vector<8x256xf32> to vector<8x256xbf16>
    %c0_15 = arith.constant 0 : index
    %c0_16 = arith.constant 0 : index
    %23 = vector.load %arg8[%c0_15, %c0_16] : memref<256x128xbf16, #tpu.memory_space<vmem>>, vector<256x128xbf16>
    %c0_17 = arith.constant 0 : index
    %c0_18 = arith.constant 0 : index
    %24 = vector.load %arg9[%c0_17, %c0_18] : memref<1x128xf32, #tpu.memory_space<vmem>>, vector<1x128xf32>
    %cst_19 = arith.constant dense<0.000000e+00> : vector<8x128xf32>
    %25 = tpu.matmul %22, %23, %cst_19 {dimension_numbers = #tpu.dot_dimension_numbers<[1], [0], [0], [1], [0, 0, 1, 1], [], []>} : vector<8x256xbf16>, vector<256x128xbf16>, vector<8x128xf32> -> vector<8x128xf32>
    %26 = vector.broadcast %24 : vector<1x128xf32> to vector<8x128xf32>
    %27 = arith.addf %25, %26 : vector<8x128xf32>
    %28 = math.tanh %27 : vector<8x128xf32>
    %29 = arith.truncf %28 : vector<8x128xf32> to vector<8x128xbf16>
    %c0_20 = arith.constant 0 : index
    %c0_21 = arith.constant 0 : index
    %30 = vector.load %arg10[%c0_20, %c0_21] : memref<128x128xbf16, #tpu.memory_space<vmem>>, vector<128x128xbf16>
    %c0_22 = arith.constant 0 : index
    %c0_23 = arith.constant 0 : index
    %31 = vector.load %arg11[%c0_22, %c0_23] : memref<1x128xf32, #tpu.memory_space<vmem>>, vector<1x128xf32>
    %cst_24 = arith.constant dense<0.000000e+00> : vector<8x128xf32>
    %32 = tpu.matmul %29, %30, %cst_24 {dimension_numbers = #tpu.dot_dimension_numbers<[1], [0], [0], [1], [0, 0, 1, 1], [], []>} : vector<8x128xbf16>, vector<128x128xbf16>, vector<8x128xf32> -> vector<8x128xf32>
    %33 = vector.broadcast %31 : vector<1x128xf32> to vector<8x128xf32>
    %34 = arith.addf %32, %33 : vector<8x128xf32>
    %c0_25 = arith.constant 0 : index
    %c0_26 = arith.constant 0 : index
    %35 = vector.load %arg12[%c0_25, %c0_26] : memref<8x128xf32, #tpu.memory_space<vmem>>, vector<8x128xf32>
    tpu.vector_store %arg12[%c0_25, %c0_26], %34 {strides = array<i32>} : memref<8x128xf32, #tpu.memory_space<vmem>>, vector<8x128xf32>,
    return
  }
  func.func @transform_0(%arg0: i32) -> (i32, i32) {
    %c0_i32 = arith.constant 0 : i32
    %c0_i32_0 = arith.constant 0 : i32
    return %arg0, %c0_i32 : i32, i32
  }
  func.func @transform_1(%arg0: i32) -> (i32, i32) {
    %c0_i32 = arith.constant 0 : i32
    %c0_i32_0 = arith.constant 0 : i32
    %c0_i32_1 = arith.constant 0 : i32
    return %c0_i32, %c0_i32_0 : i32, i32
  }
  func.func @transform_2(%arg0: i32) -> (i32, i32) {
    %c0_i32 = arith.constant 0 : i32
    %c0_i32_0 = arith.constant 0 : i32
    %c0_i32_1 = arith.constant 0 : i32
    return %c0_i32, %c0_i32_0 : i32, i32
  }
  func.func @transform_3(%arg0: i32) -> (i32, i32) {
    %c0_i32 = arith.constant 0 : i32
    %c0_i32_0 = arith.constant 0 : i32
    %c0_i32_1 = arith.constant 0 : i32
    return %c0_i32, %c0_i32_0 : i32, i32
  }
  func.func @transform_4(%arg0: i32) -> (i32, i32) {
    %c0_i32 = arith.constant 0 : i32
    %c0_i32_0 = arith.constant 0 : i32
    %c0_i32_1 = arith.constant 0 : i32
    return %c0_i32, %c0_i32_0 : i32, i32
  }
  func.func @transform_5(%arg0: i32) -> (i32, i32) {
    %c0_i32 = arith.constant 0 : i32
    %c0_i32_0 = arith.constant 0 : i32
    %c0_i32_1 = arith.constant 0 : i32
    return %c0_i32, %c0_i32_0 : i32, i32
  }
  func.func @transform_6(%arg0: i32) -> (i32, i32) {
    %c0_i32 = arith.constant 0 : i32
    %c0_i32_0 = arith.constant 0 : i32
    %c0_i32_1 = arith.constant 0 : i32
    return %c0_i32, %c0_i32_0 : i32, i32
  }
  func.func @transform_7(%arg0: i32) -> (i32, i32) {
    %c0_i32 = arith.constant 0 : i32
    %c0_i32_0 = arith.constant 0 : i32
    %c0_i32_1 = arith.constant 0 : i32
    return %c0_i32, %c0_i32_0 : i32, i32
  }
  func.func @transform_8(%arg0: i32) -> (i32, i32) {
    %c0_i32 = arith.constant 0 : i32
    %c0_i32_0 = arith.constant 0 : i32
    %c0_i32_1 = arith.constant 0 : i32
    return %c0_i32, %c0_i32_0 : i32, i32
  }
  func.func @transform_9(%arg0: i32) -> (i32, i32) {
    %c0_i32 = arith.constant 0 : i32
    %c0_i32_0 = arith.constant 0 : i32
    %c0_i32_1 = arith.constant 0 : i32
    return %c0_i32, %c0_i32_0 : i32, i32
  }
  func.func @transform_10(%arg0: i32) -> (i32, i32) {
    %c0_i32 = arith.constant 0 : i32
    %c0_i32_0 = arith.constant 0 : i32
    %c0_i32_1 = arith.constant 0 : i32
    return %c0_i32, %c0_i32_0 : i32, i32
  }
  func.func @transform_11(%arg0: i32) -> (i32, i32) {
    %c0_i32 = arith.constant 0 : i32
    %c0_i32_0 = arith.constant 0 : i32
    return %arg0, %c0_i32 : i32, i32
  }
}

</mosaic_0001>

<llo_original>
// kernel: tpu_custom_call.1
$region0: #{tpu_custom_call.1}
  #allocation0 [shape = 'u32[]', space=smem, size = 0x4, offset = 0x4, fixed_abs, tag = 'smem constant byte address 0x4 - core index']
  #allocation1 [shape = 'u32[72,128]{1,0:T(1,128)}', space=vmem, size = 0x9000, scoped, tag = 'internal scratch']
  %s0 = inlined_call_operand.hbm [shape: f32[8,32], index: 0, kind: input, shape index: {}]
  %s1 = inlined_call_operand.hbm [shape: bf16[32,256], index: 1, kind: input, shape index: {}]
  %s2 = inlined_call_operand.hbm [shape: f32[1,256], index: 2, kind: input, shape index: {}]
  %s3 = inlined_call_operand.hbm [shape: bf16[256,512], index: 3, kind: input, shape index: {}]
  %s4 = inlined_call_operand.hbm [shape: f32[1,512], index: 4, kind: input, shape index: {}]
  %s5 = inlined_call_operand.hbm [shape: bf16[512,256], index: 5, kind: input, shape index: {}]
  %s6 = inlined_call_operand.vmem [shape: f32[1,256], index: 6, kind: input, shape index: {}]
  %s7 = inlined_call_operand.hbm [shape: bf16[256,128], index: 7, kind: input, shape index: {}]
  %s8 = inlined_call_operand.vmem [shape: f32[1,128], index: 8, kind: input, shape index: {}]
  %s9 = inlined_call_operand.hbm [shape: bf16[128,128], index: 9, kind: input, shape index: {}]
  %s10 = inlined_call_operand.vmem [shape: f32[1,128], index: 10, kind: input, shape index: {}]
  %s11 = inlined_call_operand.hbm [shape: f32[8,128], index: 11, kind: output, shape index: {}]
  %s12 = sld [smem:[#allocation0]]
  $region86: #{tpu_custom_call.1} parent=0
    _
  %s14 = ssub.s32 1, %s12
  %s15 = scalar_select 0, %s14, %s12
  $region1: #{tpu_custom_call.1} parent=0
    #allocation2 [shape = 'u8[4096]{0}', space=vmem, size = 0x1000, scoped, tag = 'input window, operand 0, single buffered']
    #allocation3 [shape = 's32[1]{0}', space=sflag, size = 0x4, scoped, tag = 'scoped memory for tpu_custom_call.1']
    #allocation4 [shape = 's32[1]{0}', space=sflag, size = 0x4, scoped, tag = 'scoped memory for tpu_custom_call.1']
    #allocation5 [shape = 'u8[16384]{0}', space=vmem, size = 0x4000, scoped, tag = 'input window, operand 1, single buffered']
    #allocation6 [shape = 's32[1]{0}', space=sflag, size = 0x4, scoped, tag = 'scoped memory for tpu_custom_call.1']
    #allocation7 [shape = 'u8[1024]{0}', space=vmem, size = 0x400, scoped, tag = 'input window, operand 2, single buffered']
    #allocation8 [shape = 'u8[262144]{0}', space=vmem, size = 0x40000, scoped, tag = 'input window, operand 3, single buffered']
    #allocation9 [shape = 's32[1]{0}', space=sflag, size = 0x4, scoped, tag = 'scoped memory for tpu_custom_call.1']
    #allocation10 [shape = 'u8[2048]{0}', space=vmem, size = 0x800, scoped, tag = 'input window, operand 4, single buffered']
    #allocation11 [shape = 'u8[262144]{0}', space=vmem, size = 0x40000, scoped, tag = 'input window, operand 5, single buffered']
    #allocation12 [shape = 's32[1]{0}', space=sflag, size = 0x4, scoped, tag = 'scoped memory for tpu_custom_call.1']
    #allocation13 [shape = 'u8[65536]{0}', space=vmem, size = 0x10000, scoped, tag = 'input window, operand 7, single buffered']
    #allocation14 [shape = 'u8[32768]{0}', space=vmem, size = 0x8000, scoped, tag = 'input window, operand 9, single buffered']
    #allocation15 [shape = 's32[1]{0}', space=sflag, size = 0x4, scoped, tag = 'scoped memory for tpu_custom_call.1']
    #allocation16 [shape = 'u8[4096]{0}', space=vmem, size = 0x1000, scoped, tag = 'output window, operand 0, single buffered']
    %16 = vsyncpa [#allocation3], 0
    %17 = vsyncpa [#allocation6], 0
    %18 = vsyncpa [#allocation9], 0
    %19 = vsyncpa [#allocation12], 0
    %20 = vsyncpa [#allocation15], 0
    %21 = vsyncpa [#allocation4], 0
    // Predicated region
    $region2: #{tpu_custom_call.1} parent=1 // pred_check
      _
    $region3: #{tpu_custom_call.1} parent=1 // pred_check_branch
      %23 = sbr.rel (0) target = $region5
    $region4: #{tpu_custom_call.1} parent=1 // pred_region
      %25 = vsyncadd [#allocation3], 0
      %s27 = sshll.u32 %s0, 4
      %s28 = int_to_ptr.hbm [resolvable:$true] %s27
      %s29 = sshll.u32 [#allocation2], 4
      %s30 = int_to_ptr.vmem [resolvable:$true] %s29
      %32 = dma.hbm_to_vmem [thread:$0]  %s28, 128, %s30, [#allocation3]
    $region5: #{tpu_custom_call.1} parent=1 // pred_fallthru
      _
    // Predicated region
    $region6: #{tpu_custom_call.1} parent=1 // pred_check
      _
    $region7: #{tpu_custom_call.1} parent=1 // pred_check_branch
      %34 = sbr.rel (0) target = $region9
    $region8: #{tpu_custom_call.1} parent=1 // pred_region
      %36 = vsyncadd [#allocation6], 0
      %s37 = sshll.u32 %s1, 4
      %s38 = int_to_ptr.hbm [resolvable:$true] %s37
      %s39 = sshll.u32 [#allocation5], 4
      %s40 = int_to_ptr.vmem [resolvable:$true] %s39
      %45 = dma.hbm_to_vmem [thread:$0]  %s38, 512, %s40, [#allocation6], 128, 128, 8
    $region9: #{tpu_custom_call.1} parent=1 // pred_fallthru
      _
    // Predicated region
    $region10: #{tpu_custom_call.1} parent=1 // pred_check
      _
    $region11: #{tpu_custom_call.1} parent=1 // pred_check_branch
      %47 = sbr.rel (0) target = $region13
    $region12: #{tpu_custom_call.1} parent=1 // pred_region
      %49 = vsyncadd [#allocation6], 0
      %s51 = sshll.u32 %s2, 4
      %s52 = int_to_ptr.hbm [resolvable:$true] %s51
      %s53 = sshll.u32 [#allocation7], 4
      %s54 = int_to_ptr.vmem [resolvable:$true] %s53
      %56 = dma.hbm_to_vmem [thread:$0]  %s52, 32, %s54, [#allocation6]
    $region13: #{tpu_custom_call.1} parent=1 // pred_fallthru
      _
    // Predicated region
    $region14: #{tpu_custom_call.1} parent=1 // pred_check
      _
    $region15: #{tpu_custom_call.1} parent=1 // pred_check_branch
      %58 = sbr.rel (0) target = $region17
    $region16: #{tpu_custom_call.1} parent=1 // pred_region
      %60 = vsyncadd [#allocation9], 0
      %s61 = sshll.u32 %s3, 4
      %s62 = int_to_ptr.hbm [resolvable:$true] %s61
      %s63 = sshll.u32 [#allocation8], 4
      %s64 = int_to_ptr.vmem [resolvable:$true] %s63
      %69 = dma.hbm_to_vmem [thread:$0]  %s62, 8192, %s64, [#allocation9], 256, 256, 16
    $region17: #{tpu_custom_call.1} parent=1 // pred_fallthru
      _
    // Predicated region
    $region18: #{tpu_custom_call.1} parent=1 // pred_check
      _
    $region19: #{tpu_custom_call.1} parent=1 // pred_check_branch
      %71 = sbr.rel (0) target = $region21
    $region20: #{tpu_custom_call.1} parent=1 // pred_region
      %73 = vsyncadd [#allocation9], 0
      %s75 = sshll.u32 %s4, 4
      %s76 = int_to_ptr.hbm [resolvable:$true] %s75
      %s77 = sshll.u32 [#allocation10], 4
      %s78 = int_to_ptr.vmem [resolvable:$true] %s77
      %80 = dma.hbm_to_vmem [thread:$0]  %s76, 64, %s78, [#allocation9]
    $region21: #{tpu_custom_call.1} parent=1 // pred_fallthru
      _
    // Predicated region
    $region22: #{tpu_custom_call.1} parent=1 // pred_check
      _
    $region23: #{tpu_custom_call.1} parent=1 // pred_check_branch
      %82 = sbr.rel (0) target = $region25
    $region24: #{tpu_custom_call.1} parent=1 // pred_region
      %84 = vsyncadd [#allocation12], 0
      %s85 = sshll.u32 %s5, 4
      %s86 = int_to_ptr.hbm [resolvable:$true] %s85
      %s87 = sshll.u32 [#allocation11], 4
      %s88 = int_to_ptr.vmem [resolvable:$true] %s87
      %93 = dma.hbm_to_vmem [thread:$0]  %s86, 8192, %s88, [#allocation12], 128, 128, 8
    $region25: #{tpu_custom_call.1} parent=1 // pred_fallthru
      _
    // Predicated region
    $region26: #{tpu_custom_call.1} parent=1 // pred_check
      _
    $region27: #{tpu_custom_call.1} parent=1 // pred_check_branch
      %95 = sbr.rel (0) target = $region29
    $region28: #{tpu_custom_call.1} parent=1 // pred_region
      _
    $region29: #{tpu_custom_call.1} parent=1 // pred_fallthru
      _
    // Predicated region
    $region30: #{tpu_custom_call.1} parent=1 // pred_check
      _
    $region31: #{tpu_custom_call.1} parent=1 // pred_check_branch
      %97 = sbr.rel (0) target = $region33
    $region32: #{tpu_custom_call.1} parent=1 // pred_region
      %99 = vsyncadd [#allocation12], 0
      %s100 = sshll.u32 %s7, 4
      %s101 = int_to_ptr.hbm [resolvable:$true] %s100
      %s102 = sshll.u32 [#allocation13], 4
      %s103 = int_to_ptr.vmem [resolvable:$true] %s102
      %108 = dma.hbm_to_vmem [thread:$0]  %s101, 2048, %s103, [#allocation12], 64, 64, 4
    $region33: #{tpu_custom_call.1} parent=1 // pred_fallthru
      _
    // Predicated region
    $region34: #{tpu_custom_call.1} parent=1 // pred_check
      _
    $region35: #{tpu_custom_call.1} parent=1 // pred_check_branch
      %110 = sbr.rel (0) target = $region37
    $region36: #{tpu_custom_call.1} parent=1 // pred_region
      _
    $region37: #{tpu_custom_call.1} parent=1 // pred_fallthru
      _
    // Predicated region
    $region38: #{tpu_custom_call.1} parent=1 // pred_check
      _
    $region39: #{tpu_custom_call.1} parent=1 // pred_check_branch
      %112 = sbr.rel (0) target = $region41
    $region40: #{tpu_custom_call.1} parent=1 // pred_region
      %114 = vsyncadd [#allocation15], 0
      %s115 = sshll.u32 %s9, 4
      %s116 = int_to_ptr.hbm [resolvable:$true] %s115
      %s117 = sshll.u32 [#allocation14], 4
      %s118 = int_to_ptr.vmem [resolvable:$true] %s117
      %123 = dma.hbm_to_vmem [thread:$0]  %s116, 1024, %s118, [#allocation15], 64, 64, 4
    $region41: #{tpu_custom_call.1} parent=1 // pred_fallthru
      _
    // Predicated region
    $region42: #{tpu_custom_call.1} parent=1 // pred_check
      _
    $region43: #{tpu_custom_call.1} parent=1 // pred_check_branch
      %125 = sbr.rel (0) target = $region45
    $region44: #{tpu_custom_call.1} parent=1 // pred_region
      _
    $region45: #{tpu_custom_call.1} parent=1 // pred_fallthru
      _
    // Predicated region
    $region46: #{tpu_custom_call.1} parent=1 // pred_check
      _
    $region47: #{tpu_custom_call.1} parent=1 // pred_check_branch
      %127 = sbr.rel (0) target = $region49
    $region48: #{tpu_custom_call.1} parent=1 // pred_region
      %129 = dma.done [#allocation3], 128
    $region49: #{tpu_custom_call.1} parent=1 // pred_fallthru
      _
    // Predicated region
    $region50: #{tpu_custom_call.1} parent=1 // pred_check
      _
    $region51: #{tpu_custom_call.1} parent=1 // pred_check_branch
      %131 = sbr.rel (0) target = $region53
    $region52: #{tpu_custom_call.1} parent=1 // pred_region
      %133 = dma.done [#allocation6], 512
    $region53: #{tpu_custom_call.1} parent=1 // pred_fallthru
      _
    // Predicated region
    $region54: #{tpu_custom_call.1} parent=1 // pred_check
      _
    $region55: #{tpu_custom_call.1} parent=1 // pred_check_branch
      %135 = sbr.rel (0) target = $region57
    $region56: #{tpu_custom_call.1} parent=1 // pred_region
      %137 = dma.done [#allocation6], 32
    $region57: #{tpu_custom_call.1} parent=1 // pred_fallthru
      _
    // Predicated region
    $region58: #{tpu_custom_call.1} parent=1 // pred_check
      _
    $region59: #{tpu_custom_call.1} parent=1 // pred_check_branch
      %139 = sbr.rel (0) target = $region61
    $region60: #{tpu_custom_call.1} parent=1 // pred_region
      %141 = dma.done [#allocation9], 8192
    $region61: #{tpu_custom_call.1} parent=1 // pred_fallthru
      _
    // Predicated region
    $region62: #{tpu_custom_call.1} parent=1 // pred_check
      _
    $region63: #{tpu_custom_call.1} parent=1 // pred_check_branch
      %143 = sbr.rel (0) target = $region65
    $region64: #{tpu_custom_call.1} parent=1 // pred_region
      %145 = dma.done [#allocation9], 64
    $region65: #{tpu_custom_call.1} parent=1 // pred_fallthru
      _
    // Predicated region
    $region66: #{tpu_custom_call.1} parent=1 // pred_check
      _
    $region67: #{tpu_custom_call.1} parent=1 // pred_check_branch
      %147 = sbr.rel (0) target = $region69
    $region68: #{tpu_custom_call.1} parent=1 // pred_region
      %149 = dma.done [#allocation12], 8192
    $region69: #{tpu_custom_call.1} parent=1 // pred_fallthru
      _
    // Predicated region
    $region70: #{tpu_custom_call.1} parent=1 // pred_check
      _
    $region71: #{tpu_custom_call.1} parent=1 // pred_check_branch
      %151 = sbr.rel (0) target = $region73
    $region72: #{tpu_custom_call.1} parent=1 // pred_region
      %153 = dma.done [#allocation12], 2048
    $region73: #{tpu_custom_call.1} parent=1 // pred_fallthru
      _
    // Predicated region
    $region74: #{tpu_custom_call.1} parent=1 // pred_check
      _
    $region75: #{tpu_custom_call.1} parent=1 // pred_check_branch
      %155 = sbr.rel (0) target = $region77
    $region76: #{tpu_custom_call.1} parent=1 // pred_region
      %157 = dma.done [#allocation15], 1024
    $region77: #{tpu_custom_call.1} parent=1 // pred_fallthru
      _
    %v159 = vld [vmem:[#allocation2] sm:$0xff]
    %v160 = vpack.c.bf16 %v159, %v159
    %v161 = vld [vmem:[#allocation5] sm:$0xff]
    %v162 = vld [vmem:[#allocation5 + $0x8] sm:$0xff]
    %v163 = vld [vmem:[#allocation5 + $0x10] sm:$0xff]
    %v164 = vld [vmem:[#allocation5 + $0x18] sm:$0xff]
    %v165 = vld [vmem:[#allocation7] sm:$0x3]
    %v167 = vperm.slane %v165, 0
    %v168 = vperm.slane %v165, 1
    %v175 = vunpack.c.l.b16 %v161
    %v176 = vunpack.c.h.b16 %v161
    %v177 = vunpack.c.l.b16 %v162
    %v178 = vunpack.c.h.b16 %v162
    %v179 = vunpack.c.l.b16 %v163
    %v180 = vunpack.c.h.b16 %v163
    %v181 = vunpack.c.l.b16 %v164
    %v182 = vunpack.c.h.b16 %v164
    %v183 = vpack.c.b16 %v177, %v175
    %v184 = vpack.c.b16 %v178, %v176
    %v185 = vpack.c.b16 %v181, %v179
    %v186 = vpack.c.b16 %v182, %v180
    %vm191 = vcmask 261120
    %v193 = vsel %vm191, %v160, 0
    %195 = vmatpush.bf16.msra.mxu0 0
    %196 = vmatpush.bf16.msra.mxu0 0
    %197 = vmatpush.bf16.msra.mxu0 0
    %198 = vmatpush.bf16.msra.mxu0 0
    %199 = vmatpush.bf16.msra.mxu0 0
    %200 = vmatpush.bf16.msra.mxu0 0
    %201 = vmatpush.bf16.msra.mxu0 %v185
    %202 = vmatpush.bf16.msra.mxu0 %v183
    %203 = vmatmul.bf16.gmra.mxu0 %v193
    %v204 = vpop.f32.mrf.mxu0
    %v205 = vadd.f32 %v167, %v204
    %v206 = vpop.f32.mrf.mxu0
    %207 = vdwg.mxu0
    %208 = vmatpush.bf16.msra.mxu0 0
    %209 = vmatpush.bf16.msra.mxu0 0
    %210 = vmatpush.bf16.msra.mxu0 0
    %211 = vmatpush.bf16.msra.mxu0 0
    %212 = vmatpush.bf16.msra.mxu0 0
    %213 = vmatpush.bf16.msra.mxu0 0
    %214 = vmatpush.bf16.msra.mxu0 %v186
    %215 = vmatpush.bf16.msra.mxu0 %v184
    %216 = vmatmul.bf16.gmra.mxu0 %v193
    %v217 = vpop.f32.mrf.mxu0
    %v218 = vadd.f32 %v168, %v217
    %v219 = vpop.f32.mrf.mxu0
    %220 = vdwg.mxu0
    %v221 = vtanh.pop %v205
    %v222 = vtanh.pop %v218
    %v223 = vpack.c.bf16 %v221, %v221
    %v224 = vpack.c.bf16 %v222, %v222
    %v225 = vld [vmem:[#allocation8] sm:$0xff]
    %v226 = vld [vmem:[#allocation8 + $0x8] sm:$0xff]
    %v227 = vld [vmem:[#allocation8 + $0x10] sm:$0xff]
    %v228 = vld [vmem:[#allocation8 + $0x18] sm:$0xff]
    %v229 = vld [vmem:[#allocation8 + $0x20] sm:$0xff]
    %v230 = vld [vmem:[#allocation8 + $0x28] sm:$0xff]
    %v231 = vld [vmem:[#allocation8 + $0x30] sm:$0xff]
    %v232 = vld [vmem:[#allocation8 + $0x38] sm:$0xff]
    %v233 = vld [vmem:[#allocation8 + $0x40] sm:$0xff]
    %v234 = vld [vmem:[#allocation8 + $0x48] sm:$0xff]
    %v235 = vld [vmem:[#allocation8 + $0x50] sm:$0xff]
    %v236 = vld [vmem:[#allocation8 + $0x58] sm:$0xff]
    %v237 = vld [vmem:[#allocation8 + $0x60] sm:$0xff]
    %v238 = vld [vmem:[#allocation8 + $0x68] sm:$0xff]
    %v239 = vld [vmem:[#allocation8 + $0x70] sm:$0xff]
    %v240 = vld [vmem:[#allocation8 + $0x78] sm:$0xff]
    %v241 = vld [vmem:[#allocation8 + $0x80] sm:$0xff]
    %v242 = vld [vmem:[#allocation8 + $0x88] sm:$0xff]
    %v243 = vld [vmem:[#allocation8 + $0x90] sm:$0xff]
    %v244 = vld [vmem:[#allocation8 + $0x98] sm:$0xff]
    %v245 = vld [vmem:[#allocation8 + $0xa0] sm:$0xff]
    %v246 = vld [vmem:[#allocation8 + $0xa8] sm:$0xff]
    %v247 = vld [vmem:[#allocation8 + $0xb0] sm:$0xff]
    %v248 = vld [vmem:[#allocation8 + $0xb8] sm:$0xff]
    %v249 = vld [vmem:[#allocation8 + $0xc0] sm:$0xff]
    %v250 = vld [vmem:[#allocation8 + $0xc8] sm:$0xff]
    %v251 = vld [vmem:[#allocation8 + $0xd0] sm:$0xff]
    %v252 = vld [vmem:[#allocation8 + $0xd8] sm:$0xff]
    %v253 = vld [vmem:[#allocation8 + $0xe0] sm:$0xff]
    %v254 = vld [vmem:[#allocation8 + $0xe8] sm:$0xff]
    %v255 = vld [vmem:[#allocation8 + $0xf0] sm:$0xff]
    %v256 = vld [vmem:[#allocation8 + $0xf8] sm:$0xff]
    %v257 = vld [vmem:[#allocation8 + $0x100] sm:$0xff]
    %v258 = vld [vmem:[#allocation8 + $0x108] sm:$0xff]
    %v259 = vld [vmem:[#allocation8 + $0x110] sm:$0xff]
    %v260 = vld [vmem:[#allocation8 + $0x118] sm:$0xff]
    %v261 = vld [vmem:[#allocation8 + $0x120] sm:$0xff]
    %v262 = vld [vmem:[#allocation8 + $0x128] sm:$0xff]
    %v263 = vld [vmem:[#allocation8 + $0x130] sm:$0xff]
    %v264 = vld [vmem:[#allocation8 + $0x138] sm:$0xff]
    %v265 = vld [vmem:[#allocation8 + $0x140] sm:$0xff]
    %v266 = vld [vmem:[#allocation8 + $0x148] sm:$0xff]
    %v267 = vld [vmem:[#allocation8 + $0x150] sm:$0xff]
    %v268 = vld [vmem:[#allocation8 + $0x158] sm:$0xff]
    %v269 = vld [vmem:[#allocation8 + $0x160] sm:$0xff]
    %v270 = vld [vmem:[#allocation8 + $0x168] sm:$0xff]
    %v271 = vld [vmem:[#allocation8 + $0x170] sm:$0xff]
    %v272 = vld [vmem:[#allocation8 + $0x178] sm:$0xff]
    %v273 = vld [vmem:[#allocation8 + $0x180] sm:$0xff]
    %v274 = vld [vmem:[#allocation8 + $0x188] sm:$0xff]
    %v275 = vld [vmem:[#allocation8 + $0x190] sm:$0xff]
    %v276 = vld [vmem:[#allocation8 + $0x198] sm:$0xff]
    %v277 = vld [vmem:[#allocation8 + $0x1a0] sm:$0xff]
    %v278 = vld [vmem:[#allocation8 + $0x1a8] sm:$0xff]
    %v279 = vld [vmem:[#allocation8 + $0x1b0] sm:$0xff]
    %v280 = vld [vmem:[#allocation8 + $0x1b8] sm:$0xff]
    %v281 = vld [vmem:[#allocation8 + $0x1c0] sm:$0xff]
    %v282 = vld [vmem:[#allocation8 + $0x1c8] sm:$0xff]
    %v283 = vld [vmem:[#allocation8 + $0x1d0] sm:$0xff]
    %v284 = vld [vmem:[#allocation8 + $0x1d8] sm:$0xff]
    %v285 = vld [vmem:[#allocation8 + $0x1e0] sm:$0xff]
    %v286 = vld [vmem:[#allocation8 + $0x1e8] sm:$0xff]
    %v287 = vld [vmem:[#allocation8 + $0x1f0] sm:$0xff]
    %v288 = vld [vmem:[#allocation8 + $0x1f8] sm:$0xff]
    %v289 = vld [vmem:[#allocation10] sm:$0xf]
    %v291 = vperm.slane %v289, 0
    %v292 = vperm.slane %v289, 1
    %v293 = vperm.slane %v289, 2
    %v294 = vperm.slane %v289, 3
    %v363 = vunpack.c.l.b16 %v225
    %v364 = vunpack.c.h.b16 %v225
    %v365 = vunpack.c.l.b16 %v226
    %v366 = vunpack.c.h.b16 %v226
    %v367 = vunpack.c.l.b16 %v227
    %v368 = vunpack.c.h.b16 %v227
    %v369 = vunpack.c.l.b16 %v228
    %v370 = vunpack.c.h.b16 %v228
    %v371 = vunpack.c.l.b16 %v229
    %v372 = vunpack.c.h.b16 %v229
    %v373 = vunpack.c.l.b16 %v230
    %v374 = vunpack.c.h.b16 %v230
    %v375 = vunpack.c.l.b16 %v231
    %v376 = vunpack.c.h.b16 %v231
    %v377 = vunpack.c.l.b16 %v232
    %v378 = vunpack.c.h.b16 %v232
    %v379 = vunpack.c.l.b16 %v233
    %v380 = vunpack.c.h.b16 %v233
    %v381 = vunpack.c.l.b16 %v234
    %v382 = vunpack.c.h.b16 %v234
    %v383 = vunpack.c.l.b16 %v235
    %v384 = vunpack.c.h.b16 %v235
    %v385 = vunpack.c.l.b16 %v236
    %v386 = vunpack.c.h.b16 %v236
    %v387 = vunpack.c.l.b16 %v237
    %v388 = vunpack.c.h.b16 %v237
    %v389 = vunpack.c.l.b16 %v238
    %v390 = vunpack.c.h.b16 %v238
    %v391 = vunpack.c.l.b16 %v239
    %v392 = vunpack.c.h.b16 %v239
    %v393 = vunpack.c.l.b16 %v240
    %v394 = vunpack.c.h.b16 %v240
    %v395 = vunpack.c.l.b16 %v241
    %v396 = vunpack.c.h.b16 %v241
    %v397 = vunpack.c.l.b16 %v242
    %v398 = vunpack.c.h.b16 %v242
    %v399 = vunpack.c.l.b16 %v243
    %v400 = vunpack.c.h.b16 %v243
    %v401 = vunpack.c.l.b16 %v244
    %v402 = vunpack.c.h.b16 %v244
    %v403 = vunpack.c.l.b16 %v245
    %v404 = vunpack.c.h.b16 %v245
    %v405 = vunpack.c.l.b16 %v246
    %v406 = vunpack.c.h.b16 %v246
    %v407 = vunpack.c.l.b16 %v247
    %v408 = vunpack.c.h.b16 %v247
    %v409 = vunpack.c.l.b16 %v248
    %v410 = vunpack.c.h.b16 %v248
    %v411 = vunpack.c.l.b16 %v249
    %v412 = vunpack.c.h.b16 %v249
    %v413 = vunpack.c.l.b16 %v250
    %v414 = vunpack.c.h.b16 %v250
    %v415 = vunpack.c.l.b16 %v251
    %v416 = vunpack.c.h.b16 %v251
    %v417 = vunpack.c.l.b16 %v252
    %v418 = vunpack.c.h.b16 %v252
    %v419 = vunpack.c.l.b16 %v253
    %v420 = vunpack.c.h.b16 %v253
    %v421 = vunpack.c.l.b16 %v254
    %v422 = vunpack.c.h.b16 %v254
    %v423 = vunpack.c.l.b16 %v255
    %v424 = vunpack.c.h.b16 %v255
    %v425 = vunpack.c.l.b16 %v256
    %v426 = vunpack.c.h.b16 %v256
    %v427 = vunpack.c.l.b16 %v257
    %v428 = vunpack.c.h.b16 %v257
    %v429 = vunpack.c.l.b16 %v258
    %v430 = vunpack.c.h.b16 %v258
    %v431 = vunpack.c.l.b16 %v259
    %v432 = vunpack.c.h.b16 %v259
    %v433 = vunpack.c.l.b16 %v260
    %v434 = vunpack.c.h.b16 %v260
    %v435 = vunpack.c.l.b16 %v261
    %v436 = vunpack.c.h.b16 %v261
    %v437 = vunpack.c.l.b16 %v262
    %v438 = vunpack.c.h.b16 %v262
    %v439 = vunpack.c.l.b16 %v263
    %v440 = vunpack.c.h.b16 %v263
    %v441 = vunpack.c.l.b16 %v264
    %v442 = vunpack.c.h.b16 %v264
    %v443 = vunpack.c.l.b16 %v265
    %v444 = vunpack.c.h.b16 %v265
    %v445 = vunpack.c.l.b16 %v266
    %v446 = vunpack.c.h.b16 %v266
    %v447 = vunpack.c.l.b16 %v267
    %v448 = vunpack.c.h.b16 %v267
    %v449 = vunpack.c.l.b16 %v268
    %v450 = vunpack.c.h.b16 %v268
    %v451 = vunpack.c.l.b16 %v269
    %v452 = vunpack.c.h.b16 %v269
    %v453 = vunpack.c.l.b16 %v270
    %v454 = vunpack.c.h.b16 %v270
    %v455 = vunpack.c.l.b16 %v271
    %v456 = vunpack.c.h.b16 %v271
    %v457 = vunpack.c.l.b16 %v272
    %v458 = vunpack.c.h.b16 %v272
    %v459 = vunpack.c.l.b16 %v273
    %v460 = vunpack.c.h.b16 %v273
    %v461 = vunpack.c.l.b16 %v274
    %v462 = vunpack.c.h.b16 %v274
    %v463 = vunpack.c.l.b16 %v275
    %v464 = vunpack.c.h.b16 %v275
    %v465 = vunpack.c.l.b16 %v276
    %v466 = vunpack.c.h.b16 %v276
    %v467 = vunpack.c.l.b16 %v277
    %v468 = vunpack.c.h.b16 %v277
    %v469 = vunpack.c.l.b16 %v278
    %v470 = vunpack.c.h.b16 %v278
    %v471 = vunpack.c.l.b16 %v279
    %v472 = vunpack.c.h.b16 %v279
    %v473 = vunpack.c.l.b16 %v280
    %v474 = vunpack.c.h.b16 %v280
    %v475 = vunpack.c.l.b16 %v281
    %v476 = vunpack.c.h.b16 %v281
    %v477 = vunpack.c.l.b16 %v282
    %v478 = vunpack.c.h.b16 %v282
    %v479 = vunpack.c.l.b16 %v283
    %v480 = vunpack.c.h.b16 %v283
    %v481 = vunpack.c.l.b16 %v284
    %v482 = vunpack.c.h.b16 %v284
    %v483 = vunpack.c.l.b16 %v285
    %v484 = vunpack.c.h.b16 %v285
    %v485 = vunpack.c.l.b16 %v286
    %v486 = vunpack.c.h.b16 %v286
    %v487 = vunpack.c.l.b16 %v287
    %v488 = vunpack.c.h.b16 %v287
    %v489 = vunpack.c.l.b16 %v288
    %v490 = vunpack.c.h.b16 %v288
    %v491 = vpack.c.b16 %v367, %v363
    %v492 = vpack.c.b16 %v368, %v364
    %v493 = vpack.c.b16 %v369, %v365
    %v494 = vpack.c.b16 %v370, %v366
    %v495 = vpack.c.b16 %v375, %v371
    %v496 = vpack.c.b16 %v376, %v372
    %v497 = vpack.c.b16 %v377, %v373
    %v498 = vpack.c.b16 %v378, %v374
    %v499 = vpack.c.b16 %v383, %v379
    %v500 = vpack.c.b16 %v384, %v380
    %v501 = vpack.c.b16 %v385, %v381
    %v502 = vpack.c.b16 %v386, %v382
    %v503 = vpack.c.b16 %v391, %v387
    %v504 = vpack.c.b16 %v392, %v388
    %v505 = vpack.c.b16 %v393, %v389
    %v506 = vpack.c.b16 %v394, %v390
    %v507 = vpack.c.b16 %v399, %v395
    %v508 = vpack.c.b16 %v400, %v396
    %v509 = vpack.c.b16 %v401, %v397
    %v510 = vpack.c.b16 %v402, %v398
    %v511 = vpack.c.b16 %v407, %v403
    %v512 = vpack.c.b16 %v408, %v404
    %v513 = vpack.c.b16 %v409, %v405
    %v514 = vpack.c.b16 %v410, %v406
    %v515 = vpack.c.b16 %v415, %v411
    %v516 = vpack.c.b16 %v416, %v412
    %v517 = vpack.c.b16 %v417, %v413
    %v518 = vpack.c.b16 %v418, %v414
    %v519 = vpack.c.b16 %v423, %v419
    %v520 = vpack.c.b16 %v424, %v420
    %v521 = vpack.c.b16 %v425, %v421
    %v522 = vpack.c.b16 %v426, %v422
    %v523 = vpack.c.b16 %v431, %v427
    %v524 = vpack.c.b16 %v432, %v428
    %v525 = vpack.c.b16 %v433, %v429
    %v526 = vpack.c.b16 %v434, %v430
    %v527 = vpack.c.b16 %v439, %v435
    %v528 = vpack.c.b16 %v440, %v436
    %v529 = vpack.c.b16 %v441, %v437
    %v530 = vpack.c.b16 %v442, %v438
    %v531 = vpack.c.b16 %v447, %v443
    %v532 = vpack.c.b16 %v448, %v444
    %v533 = vpack.c.b16 %v449, %v445
    %v534 = vpack.c.b16 %v450, %v446
    %v535 = vpack.c.b16 %v455, %v451
    %v536 = vpack.c.b16 %v456, %v452
    %v537 = vpack.c.b16 %v457, %v453
    %v538 = vpack.c.b16 %v458, %v454
    %v539 = vpack.c.b16 %v463, %v459
    %v540 = vpack.c.b16 %v464, %v460
    %v541 = vpack.c.b16 %v465, %v461
    %v542 = vpack.c.b16 %v466, %v462
    %v543 = vpack.c.b16 %v471, %v467
    %v544 = vpack.c.b16 %v472, %v468
    %v545 = vpack.c.b16 %v473, %v469
    %v546 = vpack.c.b16 %v474, %v470
    %v547 = vpack.c.b16 %v479, %v475
    %v548 = vpack.c.b16 %v480, %v476
    %v549 = vpack.c.b16 %v481, %v477
    %v550 = vpack.c.b16 %v482, %v478
    %v551 = vpack.c.b16 %v487, %v483
    %v552 = vpack.c.b16 %v488, %v484
    %v553 = vpack.c.b16 %v489, %v485
    %v554 = vpack.c.b16 %v490, %v486
    %619 = vmatpush.bf16.msra.mxu0 %v519
    %620 = vmatpush.bf16.msra.mxu0 %v515
    %621 = vmatpush.bf16.msra.mxu0 %v511
    %622 = vmatpush.bf16.msra.mxu0 %v507
    %623 = vmatpush.bf16.msra.mxu0 %v503
    %624 = vmatpush.bf16.msra.mxu0 %v499
    %625 = vmatpush.bf16.msra.mxu0 %v495
    %626 = vmatpush.bf16.msra.mxu0 %v491
    %627 = vmatmul.bf16.gmra.mxu0 %v223
    %v628 = vpop.f32.mrf.mxu0
    %v629 = vadd.f32 %v291, %v628
    %v630 = vpop.f32.mrf.mxu0
    %631 = vdwg.mxu0
    %632 = vmatpush.bf16.msra.mxu0 %v551
    %633 = vmatpush.bf16.msra.mxu0 %v547
    %634 = vmatpush.bf16.msra.mxu0 %v543
    %635 = vmatpush.bf16.msra.mxu0 %v539
    %636 = vmatpush.bf16.msra.mxu0 %v535
    %637 = vmatpush.bf16.msra.mxu0 %v531
    %638 = vmatpush.bf16.msra.mxu0 %v527
    %639 = vmatpush.bf16.msra.mxu0 %v523
    %640 = vmatmul.bf16.gmra.mxu0 %v224
    %v641 = vpop.f32.mrf.mxu0
    %v642 = vadd.f32 %v629, %v641
    %v643 = vpop.f32.mrf.mxu0
    %644 = vdwg.mxu0
    %645 = vmatpush.bf16.msra.mxu0 %v520
    %646 = vmatpush.bf16.msra.mxu0 %v516
    %647 = vmatpush.bf16.msra.mxu0 %v512
    %648 = vmatpush.bf16.msra.mxu0 %v508
    %649 = vmatpush.bf16.msra.mxu0 %v504
    %650 = vmatpush.bf16.msra.mxu0 %v500
    %651 = vmatpush.bf16.msra.mxu0 %v496
    %652 = vmatpush.bf16.msra.mxu0 %v492
    %653 = vmatmul.bf16.gmra.mxu0 %v223
    %v654 = vpop.f32.mrf.mxu0
    %v655 = vadd.f32 %v292, %v654
    %v656 = vpop.f32.mrf.mxu0
    %657 = vdwg.mxu0
    %658 = vmatpush.bf16.msra.mxu0 %v552
    %659 = vmatpush.bf16.msra.mxu0 %v548
    %660 = vmatpush.bf16.msra.mxu0 %v544
    %661 = vmatpush.bf16.msra.mxu0 %v540
    %662 = vmatpush.bf16.msra.mxu0 %v536
    %663 = vmatpush.bf16.msra.mxu0 %v532
    %664 = vmatpush.bf16.msra.mxu0 %v528
    %665 = vmatpush.bf16.msra.mxu0 %v524
    %666 = vmatmul.bf16.gmra.mxu0 %v224
    %v667 = vpop.f32.mrf.mxu0
    %v668 = vadd.f32 %v655, %v667
    %v669 = vpop.f32.mrf.mxu0
    %670 = vdwg.mxu0
    %671 = vmatpush.bf16.msra.mxu0 %v521
    %672 = vmatpush.bf16.msra.mxu0 %v517
    %673 = vmatpush.bf16.msra.mxu0 %v513
    %674 = vmatpush.bf16.msra.mxu0 %v509
    %675 = vmatpush.bf16.msra.mxu0 %v505
    %676 = vmatpush.bf16.msra.mxu0 %v501
    %677 = vmatpush.bf16.msra.mxu0 %v497
    %678 = vmatpush.bf16.msra.mxu0 %v493
    %679 = vmatmul.bf16.gmra.mxu0 %v223
    %v680 = vpop.f32.mrf.mxu0
    %v681 = vadd.f32 %v293, %v680
    %v682 = vpop.f32.mrf.mxu0
    %683 = vdwg.mxu0
    %684 = vmatpush.bf16.msra.mxu0 %v553
    %685 = vmatpush.bf16.msra.mxu0 %v549
    %686 = vmatpush.bf16.msra.mxu0 %v545
    %687 = vmatpush.bf16.msra.mxu0 %v541
    %688 = vmatpush.bf16.msra.mxu0 %v537
    %689 = vmatpush.bf16.msra.mxu0 %v533
    %690 = vmatpush.bf16.msra.mxu0 %v529
    %691 = vmatpush.bf16.msra.mxu0 %v525
    %692 = vmatmul.bf16.gmra.mxu0 %v224
    %v693 = vpop.f32.mrf.mxu0
    %v694 = vadd.f32 %v681, %v693
    %v695 = vpop.f32.mrf.mxu0
    %696 = vdwg.mxu0
    %697 = vmatpush.bf16.msra.mxu0 %v522
    %698 = vmatpush.bf16.msra.mxu0 %v518
    %699 = vmatpush.bf16.msra.mxu0 %v514
    %700 = vmatpush.bf16.msra.mxu0 %v510
    %701 = vmatpush.bf16.msra.mxu0 %v506
    %702 = vmatpush.bf16.msra.mxu0 %v502
    %703 = vmatpush.bf16.msra.mxu0 %v498
    %704 = vmatpush.bf16.msra.mxu0 %v494
    %705 = vmatmul.bf16.gmra.mxu0 %v223
    %v706 = vpop.f32.mrf.mxu0
    %v707 = vadd.f32 %v294, %v706
    %v708 = vpop.f32.mrf.mxu0
    %709 = vdwg.mxu0
    %710 = vmatpush.bf16.msra.mxu0 %v554
    %711 = vmatpush.bf16.msra.mxu0 %v550
    %712 = vmatpush.bf16.msra.mxu0 %v546
    %713 = vmatpush.bf16.msra.mxu0 %v542
    %714 = vmatpush.bf16.msra.mxu0 %v538
    %715 = vmatpush.bf16.msra.mxu0 %v534
    %716 = vmatpush.bf16.msra.mxu0 %v530
    %717 = vmatpush.bf16.msra.mxu0 %v526
    %718 = vmatmul.bf16.gmra.mxu0 %v224
    %v719 = vpop.f32.mrf.mxu0
    %v720 = vadd.f32 %v707, %v719
    %v721 = vpop.f32.mrf.mxu0
    %722 = vdwg.mxu0
    %v723 = vtanh.pop %v642
    %v724 = vtanh.pop %v668
    %v725 = vtanh.pop %v694
    %v726 = vtanh.pop %v720
    %v727 = vpack.c.bf16 %v723, %v723
    %v728 = vpack.c.bf16 %v724, %v724
    %v729 = vpack.c.bf16 %v725, %v725
    %v730 = vpack.c.bf16 %v726, %v726
    %v731 = vld [vmem:[#allocation11] sm:$0xff]
    %v732 = vld [vmem:[#allocation11 + $0x8] sm:$0xff]
    %v733 = vld [vmem:[#allocation11 + $0x10] sm:$0xff]
    %v734 = vld [vmem:[#allocation11 + $0x18] sm:$0xff]
    %v735 = vld [vmem:[#allocation11 + $0x20] sm:$0xff]
    %v736 = vld [vmem:[#allocation11 + $0x28] sm:$0xff]
    %v737 = vld [vmem:[#allocation11 + $0x30] sm:$0xff]
    %v738 = vld [vmem:[#allocation11 + $0x38] sm:$0xff]
    %v739 = vld [vmem:[#allocation11 + $0x40] sm:$0xff]
    %v740 = vld [vmem:[#allocation11 + $0x48] sm:$0xff]
    %v741 = vld [vmem:[#allocation11 + $0x50] sm:$0xff]
    %v742 = vld [vmem:[#allocation11 + $0x58] sm:$0xff]
    %v743 = vld [vmem:[#allocation11 + $0x60] sm:$0xff]
    %v744 = vld [vmem:[#allocation11 + $0x68] sm:$0xff]
    %v745 = vld [vmem:[#allocation11 + $0x70] sm:$0xff]
    %v746 = vld [vmem:[#allocation11 + $0x78] sm:$0xff]
    %v747 = vld [vmem:[#allocation11 + $0x80] sm:$0xff]
    %v748 = vld [vmem:[#allocation11 + $0x88] sm:$0xff]
    %v749 = vld [vmem:[#allocation11 + $0x90] sm:$0xff]
    %v750 = vld [vmem:[#allocation11 + $0x98] sm:$0xff]
    %v751 = vld [vmem:[#allocation11 + $0xa0] sm:$0xff]
    %v752 = vld [vmem:[#allocation11 + $0xa8] sm:$0xff]
    %v753 = vld [vmem:[#allocation11 + $0xb0] sm:$0xff]
    %v754 = vld [vmem:[#allocation11 + $0xb8] sm:$0xff]
    %v755 = vld [vmem:[#allocation11 + $0xc0] sm:$0xff]
    %v756 = vld [vmem:[#allocation11 + $0xc8] sm:$0xff]
    %v757 = vld [vmem:[#allocation11 + $0xd0] sm:$0xff]
    %v758 = vld [vmem:[#allocation11 + $0xd8] sm:$0xff]
    %v759 = vld [vmem:[#allocation11 + $0xe0] sm:$0xff]
    %v760 = vld [vmem:[#allocation11 + $0xe8] sm:$0xff]
    %v761 = vld [vmem:[#allocation11 + $0xf0] sm:$0xff]
    %v762 = vld [vmem:[#allocation11 + $0xf8] sm:$0xff]
    %v763 = vld [vmem:[#allocation11 + $0x100] sm:$0xff]
    %v764 = vld [vmem:[#allocation11 + $0x108] sm:$0xff]
    %v765 = vld [vmem:[#allocation11 + $0x110] sm:$0xff]
    %v766 = vld [vmem:[#allocation11 + $0x118] sm:$0xff]
    %v767 = vld [vmem:[#allocation11 + $0x120] sm:$0xff]
    %v768 = vld [vmem:[#allocation11 + $0x128] sm:$0xff]
    %v769 = vld [vmem:[#allocation11 + $0x130] sm:$0xff]
    %v770 = vld [vmem:[#allocation11 + $0x138] sm:$0xff]
    %v771 = vld [vmem:[#allocation11 + $0x140] sm:$0xff]
    %v772 = vld [vmem:[#allocation11 + $0x148] sm:$0xff]
    %v773 = vld [vmem:[#allocation11 + $0x150] sm:$0xff]
    %v774 = vld [vmem:[#allocation11 + $0x158] sm:$0xff]
    %v775 = vld [vmem:[#allocation11 + $0x160] sm:$0xff]
    %v776 = vld [vmem:[#allocation11 + $0x168] sm:$0xff]
    %v777 = vld [vmem:[#allocation11 + $0x170] sm:$0xff]
    %v778 = vld [vmem:[#allocation11 + $0x178] sm:$0xff]
    %v779 = vld [vmem:[#allocation11 + $0x180] sm:$0xff]
    %v780 = vld [vmem:[#allocation11 + $0x188] sm:$0xff]
    %v781 = vld [vmem:[#allocation11 + $0x190] sm:$0xff]
    %v782 = vld [vmem:[#allocation11 + $0x198] sm:$0xff]
    %v783 = vld [vmem:[#allocation11 + $0x1a0] sm:$0xff]
    %v784 = vld [vmem:[#allocation11 + $0x1a8] sm:$0xff]
    %v785 = vld [vmem:[#allocation11 + $0x1b0] sm:$0xff]
    %v786 = vld [vmem:[#allocation11 + $0x1b8] sm:$0xff]
    %v787 = vld [vmem:[#allocation11 + $0x1c0] sm:$0xff]
    %v788 = vld [vmem:[#allocation11 + $0x1c8] sm:$0xff]
    %v789 = vld [vmem:[#allocation11 + $0x1d0] sm:$0xff]
    %v790 = vld [vmem:[#allocation11 + $0x1d8] sm:$0xff]
    %v791 = vld [vmem:[#allocation11 + $0x1e0] sm:$0xff]
    %v792 = vld [vmem:[#allocation11 + $0x1e8] sm:$0xff]
    %v793 = vld [vmem:[#allocation11 + $0x1f0] sm:$0xff]
    %v794 = vld [vmem:[#allocation11 + $0x1f8] sm:$0xff]
    %v795 = vld [vmem:[%s6] sm:$0x3]
    %v797 = vperm.slane %v795, 0
    %v798 = vperm.slane %v795, 1
    %v865 = vunpack.c.l.b16 %v731
    %v866 = vunpack.c.h.b16 %v731
    %v867 = vunpack.c.l.b16 %v732
    %v868 = vunpack.c.h.b16 %v732
    %v869 = vunpack.c.l.b16 %v733
    %v870 = vunpack.c.h.b16 %v733
    %v871 = vunpack.c.l.b16 %v734
    %v872 = vunpack.c.h.b16 %v734
    %v873 = vunpack.c.l.b16 %v735
    %v874 = vunpack.c.h.b16 %v735
    %v875 = vunpack.c.l.b16 %v736
    %v876 = vunpack.c.h.b16 %v736
    %v877 = vunpack.c.l.b16 %v737
    %v878 = vunpack.c.h.b16 %v737
    %v879 = vunpack.c.l.b16 %v738
    %v880 = vunpack.c.h.b16 %v738
    %v881 = vunpack.c.l.b16 %v739
    %v882 = vunpack.c.h.b16 %v739
    %v883 = vunpack.c.l.b16 %v740
    %v884 = vunpack.c.h.b16 %v740
    %v885 = vunpack.c.l.b16 %v741
    %v886 = vunpack.c.h.b16 %v741
    %v887 = vunpack.c.l.b16 %v742
    %v888 = vunpack.c.h.b16 %v742
    %v889 = vunpack.c.l.b16 %v743
    %v890 = vunpack.c.h.b16 %v743
    %v891 = vunpack.c.l.b16 %v744
    %v892 = vunpack.c.h.b16 %v744
    %v893 = vunpack.c.l.b16 %v745
    %v894 = vunpack.c.h.b16 %v745
    %v895 = vunpack.c.l.b16 %v746
    %v896 = vunpack.c.h.b16 %v746
    %v897 = vunpack.c.l.b16 %v747
    %v898 = vunpack.c.h.b16 %v747
    %v899 = vunpack.c.l.b16 %v748
    %v900 = vunpack.c.h.b16 %v748
    %v901 = vunpack.c.l.b16 %v749
    %v902 = vunpack.c.h.b16 %v749
    %v903 = vunpack.c.l.b16 %v750
    %v904 = vunpack.c.h.b16 %v750
    %v905 = vunpack.c.l.b16 %v751
    %v906 = vunpack.c.h.b16 %v751
    %v907 = vunpack.c.l.b16 %v752
    %v908 = vunpack.c.h.b16 %v752
    %v909 = vunpack.c.l.b16 %v753
    %v910 = vunpack.c.h.b16 %v753
    %v911 = vunpack.c.l.b16 %v754
    %v912 = vunpack.c.h.b16 %v754
    %v913 = vunpack.c.l.b16 %v755
    %v914 = vunpack.c.h.b16 %v755
    %v915 = vunpack.c.l.b16 %v756
    %v916 = vunpack.c.h.b16 %v756
    %v917 = vunpack.c.l.b16 %v757
    %v918 = vunpack.c.h.b16 %v757
    %v919 = vunpack.c.l.b16 %v758
    %v920 = vunpack.c.h.b16 %v758
    %v921 = vunpack.c.l.b16 %v759
    %v922 = vunpack.c.h.b16 %v759
    %v923 = vunpack.c.l.b16 %v760
    %v924 = vunpack.c.h.b16 %v760
    %v925 = vunpack.c.l.b16 %v761
    %v926 = vunpack.c.h.b16 %v761
    %v927 = vunpack.c.l.b16 %v762
    %v928 = vunpack.c.h.b16 %v762
    %v929 = vunpack.c.l.b16 %v763
    %v930 = vunpack.c.h.b16 %v763
    %v931 = vunpack.c.l.b16 %v764
    %v932 = vunpack.c.h.b16 %v764
    %v933 = vunpack.c.l.b16 %v765
    %v934 = vunpack.c.h.b16 %v765
    %v935 = vunpack.c.l.b16 %v766
    %v936 = vunpack.c.h.b16 %v766
    %v937 = vunpack.c.l.b16 %v767
    %v938 = vunpack.c.h.b16 %v767
    %v939 = vunpack.c.l.b16 %v768
    %v940 = vunpack.c.h.b16 %v768
    %v941 = vunpack.c.l.b16 %v769
    %v942 = vunpack.c.h.b16 %v769
    %v943 = vunpack.c.l.b16 %v770
    %v944 = vunpack.c.h.b16 %v770
    %v945 = vunpack.c.l.b16 %v771
    %v946 = vunpack.c.h.b16 %v771
    %v947 = vunpack.c.l.b16 %v772
    %v948 = vunpack.c.h.b16 %v772
    %v949 = vunpack.c.l.b16 %v773
    %v950 = vunpack.c.h.b16 %v773
    %v951 = vunpack.c.l.b16 %v774
    %v952 = vunpack.c.h.b16 %v774
    %v953 = vunpack.c.l.b16 %v775
    %v954 = vunpack.c.h.b16 %v775
    %v955 = vunpack.c.l.b16 %v776
    %v956 = vunpack.c.h.b16 %v776
    %v957 = vunpack.c.l.b16 %v777
    %v958 = vunpack.c.h.b16 %v777
    %v959 = vunpack.c.l.b16 %v778
    %v960 = vunpack.c.h.b16 %v778
    %v961 = vunpack.c.l.b16 %v779
    %v962 = vunpack.c.h.b16 %v779
    %v963 = vunpack.c.l.b16 %v780
    %v964 = vunpack.c.h.b16 %v780
    %v965 = vunpack.c.l.b16 %v781
    %v966 = vunpack.c.h.b16 %v781
    %v967 = vunpack.c.l.b16 %v782
    %v968 = vunpack.c.h.b16 %v782
    %v969 = vunpack.c.l.b16 %v783
    %v970 = vunpack.c.h.b16 %v783
    %v971 = vunpack.c.l.b16 %v784
    %v972 = vunpack.c.h.b16 %v784
    %v973 = vunpack.c.l.b16 %v785
    %v974 = vunpack.c.h.b16 %v785
    %v975 = vunpack.c.l.b16 %v786
    %v976 = vunpack.c.h.b16 %v786
    %v977 = vunpack.c.l.b16 %v787
    %v978 = vunpack.c.h.b16 %v787
    %v979 = vunpack.c.l.b16 %v788
    %v980 = vunpack.c.h.b16 %v788
    %v981 = vunpack.c.l.b16 %v789
    %v982 = vunpack.c.h.b16 %v789
    %v983 = vunpack.c.l.b16 %v790
    %v984 = vunpack.c.h.b16 %v790
    %v985 = vunpack.c.l.b16 %v791
    %v986 = vunpack.c.h.b16 %v791
    %v987 = vunpack.c.l.b16 %v792
    %v988 = vunpack.c.h.b16 %v792
    %v989 = vunpack.c.l.b16 %v793
    %v990 = vunpack.c.h.b16 %v793
    %v991 = vunpack.c.l.b16 %v794
    %v992 = vunpack.c.h.b16 %v794
    %v993 = vpack.c.b16 %v867, %v865
    %v994 = vpack.c.b16 %v868, %v866
    %v995 = vpack.c.b16 %v871, %v869
    %v996 = vpack.c.b16 %v872, %v870
    %v997 = vpack.c.b16 %v875, %v873
    %v998 = vpack.c.b16 %v876, %v874
    %v999 = vpack.c.b16 %v879, %v877
    %v1000 = vpack.c.b16 %v880, %v878
    %v1001 = vpack.c.b16 %v883, %v881
    %v1002 = vpack.c.b16 %v884, %v882
    %v1003 = vpack.c.b16 %v887, %v885
    %v1004 = vpack.c.b16 %v888, %v886
    %v1005 = vpack.c.b16 %v891, %v889
    %v1006 = vpack.c.b16 %v892, %v890
    %v1007 = vpack.c.b16 %v895, %v893
    %v1008 = vpack.c.b16 %v896, %v894
    %v1009 = vpack.c.b16 %v899, %v897
    %v1010 = vpack.c.b16 %v900, %v898
    %v1011 = vpack.c.b16 %v903, %v901
    %v1012 = vpack.c.b16 %v904, %v902
    %v1013 = vpack.c.b16 %v907, %v905
    %v1014 = vpack.c.b16 %v908, %v906
    %v1015 = vpack.c.b16 %v911, %v909
    %v1016 = vpack.c.b16 %v912, %v910
    %v1017 = vpack.c.b16 %v915, %v913
    %v1018 = vpack.c.b16 %v916, %v914
    %v1019 = vpack.c.b16 %v919, %v917
    %v1020 = vpack.c.b16 %v920, %v918
    %v1021 = vpack.c.b16 %v923, %v921
    %v1022 = vpack.c.b16 %v924, %v922
    %v1023 = vpack.c.b16 %v927, %v925
    %v1024 = vpack.c.b16 %v928, %v926
    %v1025 = vpack.c.b16 %v931, %v929
    %v1026 = vpack.c.b16 %v932, %v930
    %v1027 = vpack.c.b16 %v935, %v933
    %v1028 = vpack.c.b16 %v936, %v934
    %v1029 = vpack.c.b16 %v939, %v937
    %v1030 = vpack.c.b16 %v940, %v938
    %v1031 = vpack.c.b16 %v943, %v941
    %v1032 = vpack.c.b16 %v944, %v942
    %v1033 = vpack.c.b16 %v947, %v945
    %v1034 = vpack.c.b16 %v948, %v946
    %v1035 = vpack.c.b16 %v951, %v949
    %v1036 = vpack.c.b16 %v952, %v950
    %v1037 = vpack.c.b16 %v955, %v953
    %v1038 = vpack.c.b16 %v956, %v954
    %v1039 = vpack.c.b16 %v959, %v957
    %v1040 = vpack.c.b16 %v960, %v958
    %v1041 = vpack.c.b16 %v963, %v961
    %v1042 = vpack.c.b16 %v964, %v962
    %v1043 = vpack.c.b16 %v967, %v965
    %v1044 = vpack.c.b16 %v968, %v966
    %v1045 = vpack.c.b16 %v971, %v969
    %v1046 = vpack.c.b16 %v972, %v970
    %v1047 = vpack.c.b16 %v975, %v973
    %v1048 = vpack.c.b16 %v976, %v974
    %v1049 = vpack.c.b16 %v979, %v977
    %v1050 = vpack.c.b16 %v980, %v978
    %v1051 = vpack.c.b16 %v983, %v981
    %v1052 = vpack.c.b16 %v984, %v982
    %v1053 = vpack.c.b16 %v987, %v985
    %v1054 = vpack.c.b16 %v988, %v986
    %v1055 = vpack.c.b16 %v991, %v989
    %v1056 = vpack.c.b16 %v992, %v990
    %1121 = vmatpush.bf16.msra.mxu0 %v1007
    %1122 = vmatpush.bf16.msra.mxu0 %v1005
    %1123 = vmatpush.bf16.msra.mxu0 %v1003
    %1124 = vmatpush.bf16.msra.mxu0 %v1001
    %1125 = vmatpush.bf16.msra.mxu0 %v999
    %1126 = vmatpush.bf16.msra.mxu0 %v997
    %1127 = vmatpush.bf16.msra.mxu0 %v995
    %1128 = vmatpush.bf16.msra.mxu0 %v993
    %1129 = vmatmul.bf16.gmra.mxu0 %v727
    %v1130 = vpop.f32.mrf.mxu0
    %v1131 = vadd.f32 %v797, %v1130
    %v1132 = vpop.f32.mrf.mxu0
    %1133 = vdwg.mxu0
    %1134 = vmatpush.bf16.msra.mxu0 %v1023
    %1135 = vmatpush.bf16.msra.mxu0 %v1021
    %1136 = vmatpush.bf16.msra.mxu0 %v1019
    %1137 = vmatpush.bf16.msra.mxu0 %v1017
    %1138 = vmatpush.bf16.msra.mxu0 %v1015
    %1139 = vmatpush.bf16.msra.mxu0 %v1013
    %1140 = vmatpush.bf16.msra.mxu0 %v1011
    %1141 = vmatpush.bf16.msra.mxu0 %v1009
    %1142 = vmatmul.bf16.gmra.mxu0 %v728
    %v1143 = vpop.f32.mrf.mxu0
    %v1144 = vadd.f32 %v1131, %v1143
    %v1145 = vpop.f32.mrf.mxu0
    %1146 = vdwg.mxu0
    %1147 = vmatpush.bf16.msra.mxu0 %v1039
    %1148 = vmatpush.bf16.msra.mxu0 %v1037
    %1149 = vmatpush.bf16.msra.mxu0 %v1035
    %1150 = vmatpush.bf16.msra.mxu0 %v1033
    %1151 = vmatpush.bf16.msra.mxu0 %v1031
    %1152 = vmatpush.bf16.msra.mxu0 %v1029
    %1153 = vmatpush.bf16.msra.mxu0 %v1027
    %1154 = vmatpush.bf16.msra.mxu0 %v1025
    %1155 = vmatmul.bf16.gmra.mxu0 %v729
    %v1156 = vpop.f32.mrf.mxu0
    %v1157 = vadd.f32 %v1144, %v1156
    %v1158 = vpop.f32.mrf.mxu0
    %1159 = vdwg.mxu0
    %1160 = vmatpush.bf16.msra.mxu0 %v1055
    %1161 = vmatpush.bf16.msra.mxu0 %v1053
    %1162 = vmatpush.bf16.msra.mxu0 %v1051
    %1163 = vmatpush.bf16.msra.mxu0 %v1049
    %1164 = vmatpush.bf16.msra.mxu0 %v1047
    %1165 = vmatpush.bf16.msra.mxu0 %v1045
    %1166 = vmatpush.bf16.msra.mxu0 %v1043
    %1167 = vmatpush.bf16.msra.mxu0 %v1041
    %1168 = vmatmul.bf16.gmra.mxu0 %v730
    %v1169 = vpop.f32.mrf.mxu0
    %v1170 = vadd.f32 %v1157, %v1169
    %v1171 = vpop.f32.mrf.mxu0
    %1172 = vdwg.mxu0
    %1173 = vmatpush.bf16.msra.mxu0 %v1008
    %1174 = vmatpush.bf16.msra.mxu0 %v1006
    %1175 = vmatpush.bf16.msra.mxu0 %v1004
    %1176 = vmatpush.bf16.msra.mxu0 %v1002
    %1177 = vmatpush.bf16.msra.mxu0 %v1000
    %1178 = vmatpush.bf16.msra.mxu0 %v998
    %1179 = vmatpush.bf16.msra.mxu0 %v996
    %1180 = vmatpush.bf16.msra.mxu0 %v994
    %1181 = vmatmul.bf16.gmra.mxu0 %v727
    %v1182 = vpop.f32.mrf.mxu0
    %v1183 = vadd.f32 %v798, %v1182
    %v1184 = vpop.f32.mrf.mxu0
    %1185 = vdwg.mxu0
    %1186 = vmatpush.bf16.msra.mxu0 %v1024
    %1187 = vmatpush.bf16.msra.mxu0 %v1022
    %1188 = vmatpush.bf16.msra.mxu0 %v1020
    %1189 = vmatpush.bf16.msra.mxu0 %v1018
    %1190 = vmatpush.bf16.msra.mxu0 %v1016
    %1191 = vmatpush.bf16.msra.mxu0 %v1014
    %1192 = vmatpush.bf16.msra.mxu0 %v1012
    %1193 = vmatpush.bf16.msra.mxu0 %v1010
    %1194 = vmatmul.bf16.gmra.mxu0 %v728
    %v1195 = vpop.f32.mrf.mxu0
    %v1196 = vadd.f32 %v1183, %v1195
    %v1197 = vpop.f32.mrf.mxu0
    %1198 = vdwg.mxu0
    %1199 = vmatpush.bf16.msra.mxu0 %v1040
    %1200 = vmatpush.bf16.msra.mxu0 %v1038
    %1201 = vmatpush.bf16.msra.mxu0 %v1036
    %1202 = vmatpush.bf16.msra.mxu0 %v1034
    %1203 = vmatpush.bf16.msra.mxu0 %v1032
    %1204 = vmatpush.bf16.msra.mxu0 %v1030
    %1205 = vmatpush.bf16.msra.mxu0 %v1028
    %1206 = vmatpush.bf16.msra.mxu0 %v1026
    %1207 = vmatmul.bf16.gmra.mxu0 %v729
    %v1208 = vpop.f32.mrf.mxu0
    %v1209 = vadd.f32 %v1196, %v1208
    %v1210 = vpop.f32.mrf.mxu0
    %1211 = vdwg.mxu0
    %1212 = vmatpush.bf16.msra.mxu0 %v1056
    %1213 = vmatpush.bf16.msra.mxu0 %v1054
    %1214 = vmatpush.bf16.msra.mxu0 %v1052
    %1215 = vmatpush.bf16.msra.mxu0 %v1050
    %1216 = vmatpush.bf16.msra.mxu0 %v1048
    %1217 = vmatpush.bf16.msra.mxu0 %v1046
    %1218 = vmatpush.bf16.msra.mxu0 %v1044
    %1219 = vmatpush.bf16.msra.mxu0 %v1042
    %1220 = vmatmul.bf16.gmra.mxu0 %v730
    %v1221 = vpop.f32.mrf.mxu0
    %v1222 = vadd.f32 %v1209, %v1221
    %v1223 = vpop.f32.mrf.mxu0
    %1224 = vdwg.mxu0
    %v1225 = vtanh.pop %v1170
    %v1226 = vtanh.pop %v1222
    %v1227 = vpack.c.bf16 %v1225, %v1225
    %v1228 = vpack.c.bf16 %v1226, %v1226
    %v1229 = vld [vmem:[#allocation13] sm:$0xf]
    %v1230 = vld [vmem:[#allocation13 + $0x4] sm:$0xf]
    %v1231 = vld [vmem:[#allocation13 + $0x8] sm:$0xf]
    %v1232 = vld [vmem:[#allocation13 + $0xc] sm:$0xf]
    %v1233 = vld [vmem:[#allocation13 + $0x10] sm:$0xf]
    %v1234 = vld [vmem:[#allocation13 + $0x14] sm:$0xf]
    %v1235 = vld [vmem:[#allocation13 + $0x18] sm:$0xf]
    %v1236 = vld [vmem:[#allocation13 + $0x1c] sm:$0xf]
    %v1237 = vld [vmem:[#allocation13 + $0x20] sm:$0xf]
    %v1238 = vld [vmem:[#allocation13 + $0x24] sm:$0xf]
    %v1239 = vld [vmem:[#allocation13 + $0x28] sm:$0xf]
    %v1240 = vld [vmem:[#allocation13 + $0x2c] sm:$0xf]
    %v1241 = vld [vmem:[#allocation13 + $0x30] sm:$0xf]
    %v1242 = vld [vmem:[#allocation13 + $0x34] sm:$0xf]
    %v1243 = vld [vmem:[#allocation13 + $0x38] sm:$0xf]
    %v1244 = vld [vmem:[#allocation13 + $0x3c] sm:$0xf]
    %v1245 = vld [vmem:[#allocation13 + $0x40] sm:$0xf]
    %v1246 = vld [vmem:[#allocation13 + $0x44] sm:$0xf]
    %v1247 = vld [vmem:[#allocation13 + $0x48] sm:$0xf]
    %v1248 = vld [vmem:[#allocation13 + $0x4c] sm:$0xf]
    %v1249 = vld [vmem:[#allocation13 + $0x50] sm:$0xf]
    %v1250 = vld [vmem:[#allocation13 + $0x54] sm:$0xf]
    %v1251 = vld [vmem:[#allocation13 + $0x58] sm:$0xf]
    %v1252 = vld [vmem:[#allocation13 + $0x5c] sm:$0xf]
    %v1253 = vld [vmem:[#allocation13 + $0x60] sm:$0xf]
    %v1254 = vld [vmem:[#allocation13 + $0x64] sm:$0xf]
    %v1255 = vld [vmem:[#allocation13 + $0x68] sm:$0xf]
    %v1256 = vld [vmem:[#allocation13 + $0x6c] sm:$0xf]
    %v1257 = vld [vmem:[#allocation13 + $0x70] sm:$0xf]
    %v1258 = vld [vmem:[#allocation13 + $0x74] sm:$0xf]
    %v1259 = vld [vmem:[#allocation13 + $0x78] sm:$0xf]
    %v1260 = vld [vmem:[#allocation13 + $0x7c] sm:$0xf]
    %v1261 = vld [vmem:[%s8] sm:$0x1]
    %v1263 = vperm.slane %v1261, 0
    %v1297 = vunpack.c.l.b16 %v1229
    %v1298 = vunpack.c.l.b16 %v1230
    %v1299 = vunpack.c.l.b16 %v1231
    %v1300 = vunpack.c.l.b16 %v1232
    %v1301 = vunpack.c.l.b16 %v1233
    %v1302 = vunpack.c.l.b16 %v1234
    %v1303 = vunpack.c.l.b16 %v1235
    %v1304 = vunpack.c.l.b16 %v1236
    %v1305 = vunpack.c.l.b16 %v1237
    %v1306 = vunpack.c.l.b16 %v1238
    %v1307 = vunpack.c.l.b16 %v1239
    %v1308 = vunpack.c.l.b16 %v1240
    %v1309 = vunpack.c.l.b16 %v1241
    %v1310 = vunpack.c.l.b16 %v1242
    %v1311 = vunpack.c.l.b16 %v1243
    %v1312 = vunpack.c.l.b16 %v1244
    %v1313 = vunpack.c.l.b16 %v1245
    %v1314 = vunpack.c.l.b16 %v1246
    %v1315 = vunpack.c.l.b16 %v1247
    %v1316 = vunpack.c.l.b16 %v1248
    %v1317 = vunpack.c.l.b16 %v1249
    %v1318 = vunpack.c.l.b16 %v1250
    %v1319 = vunpack.c.l.b16 %v1251
    %v1320 = vunpack.c.l.b16 %v1252
    %v1321 = vunpack.c.l.b16 %v1253
    %v1322 = vunpack.c.l.b16 %v1254
    %v1323 = vunpack.c.l.b16 %v1255
    %v1324 = vunpack.c.l.b16 %v1256
    %v1325 = vunpack.c.l.b16 %v1257
    %v1326 = vunpack.c.l.b16 %v1258
    %v1327 = vunpack.c.l.b16 %v1259
    %v1328 = vunpack.c.l.b16 %v1260
    %v1329 = vpack.c.b16 %v1298, %v1297
    %v1330 = vpack.c.b16 %v1300, %v1299
    %v1331 = vpack.c.b16 %v1302, %v1301
    %v1332 = vpack.c.b16 %v1304, %v1303
    %v1333 = vpack.c.b16 %v1306, %v1305
    %v1334 = vpack.c.b16 %v1308, %v1307
    %v1335 = vpack.c.b16 %v1310, %v1309
    %v1336 = vpack.c.b16 %v1312, %v1311
    %v1337 = vpack.c.b16 %v1314, %v1313
    %v1338 = vpack.c.b16 %v1316, %v1315
    %v1339 = vpack.c.b16 %v1318, %v1317
    %v1340 = vpack.c.b16 %v1320, %v1319
    %v1341 = vpack.c.b16 %v1322, %v1321
    %v1342 = vpack.c.b16 %v1324, %v1323
    %v1343 = vpack.c.b16 %v1326, %v1325
    %v1344 = vpack.c.b16 %v1328, %v1327
    %1361 = vmatpush.bf16.msra.mxu0 %v1336
    %1362 = vmatpush.bf16.msra.mxu0 %v1335
    %1363 = vmatpush.bf16.msra.mxu0 %v1334
    %1364 = vmatpush.bf16.msra.mxu0 %v1333
    %1365 = vmatpush.bf16.msra.mxu0 %v1332
    %1366 = vmatpush.bf16.msra.mxu0 %v1331
    %1367 = vmatpush.bf16.msra.mxu0 %v1330
    %1368 = vmatpush.bf16.msra.mxu0 %v1329
    %1369 = vmatmul.bf16.gmra.mxu0 %v1227
    %v1370 = vpop.f32.mrf.mxu0
    %v1371 = vadd.f32 %v1263, %v1370
    %v1372 = vpop.f32.mrf.mxu0
    %1373 = vdwg.mxu0
    %1374 = vmatpush.bf16.msra.mxu0 %v1344
    %1375 = vmatpush.bf16.msra.mxu0 %v1343
    %1376 = vmatpush.bf16.msra.mxu0 %v1342
    %1377 = vmatpush.bf16.msra.mxu0 %v1341
    %1378 = vmatpush.bf16.msra.mxu0 %v1340
    %1379 = vmatpush.bf16.msra.mxu0 %v1339
    %1380 = vmatpush.bf16.msra.mxu0 %v1338
    %1381 = vmatpush.bf16.msra.mxu0 %v1337
    %1382 = vmatmul.bf16.gmra.mxu0 %v1228
    %v1383 = vpop.f32.mrf.mxu0
    %v1384 = vadd.f32 %v1371, %v1383
    %v1385 = vpop.f32.mrf.mxu0
    %1386 = vdwg.mxu0
    %v1387 = vtanh.pop %v1384
    %v1388 = vpack.c.bf16 %v1387, %v1387
    %v1389 = vld [vmem:[#allocation14] sm:$0xf]
    %v1390 = vld [vmem:[#allocation14 + $0x4] sm:$0xf]
    %v1391 = vld [vmem:[#allocation14 + $0x8] sm:$0xf]
    %v1392 = vld [vmem:[#allocation14 + $0xc] sm:$0xf]
    %v1393 = vld [vmem:[#allocation14 + $0x10] sm:$0xf]
    %v1394 = vld [vmem:[#allocation14 + $0x14] sm:$0xf]
    %v1395 = vld [vmem:[#allocation14 + $0x18] sm:$0xf]
    %v1396 = vld [vmem:[#allocation14 + $0x1c] sm:$0xf]
    %v1397 = vld [vmem:[#allocation14 + $0x20] sm:$0xf]
    %v1398 = vld [vmem:[#allocation14 + $0x24] sm:$0xf]
    %v1399 = vld [vmem:[#allocation14 + $0x28] sm:$0xf]
    %v1400 = vld [vmem:[#allocation14 + $0x2c] sm:$0xf]
    %v1401 = vld [vmem:[#allocation14 + $0x30] sm:$0xf]
    %v1402 = vld [vmem:[#allocation14 + $0x34] sm:$0xf]
    %v1403 = vld [vmem:[#allocation14 + $0x38] sm:$0xf]
    %v1404 = vld [vmem:[#allocation14 + $0x3c] sm:$0xf]
    %v1405 = vld [vmem:[%s10] sm:$0x1]
    %v1407 = vperm.slane %v1405, 0
    %v1425 = vunpack.c.l.b16 %v1389
    %v1426 = vunpack.c.l.b16 %v1390
    %v1427 = vunpack.c.l.b16 %v1391
    %v1428 = vunpack.c.l.b16 %v1392
    %v1429 = vunpack.c.l.b16 %v1393
    %v1430 = vunpack.c.l.b16 %v1394
    %v1431 = vunpack.c.l.b16 %v1395
    %v1432 = vunpack.c.l.b16 %v1396
    %v1433 = vunpack.c.l.b16 %v1397
    %v1434 = vunpack.c.l.b16 %v1398
    %v1435 = vunpack.c.l.b16 %v1399
    %v1436 = vunpack.c.l.b16 %v1400
    %v1437 = vunpack.c.l.b16 %v1401
    %v1438 = vunpack.c.l.b16 %v1402
    %v1439 = vunpack.c.l.b16 %v1403
    %v1440 = vunpack.c.l.b16 %v1404
    %v1441 = vpack.c.b16 %v1426, %v1425
    %v1442 = vpack.c.b16 %v1428, %v1427
    %v1443 = vpack.c.b16 %v1430, %v1429
    %v1444 = vpack.c.b16 %v1432, %v1431
    %v1445 = vpack.c.b16 %v1434, %v1433
    %v1446 = vpack.c.b16 %v1436, %v1435
    %v1447 = vpack.c.b16 %v1438, %v1437
    %v1448 = vpack.c.b16 %v1440, %v1439
    %1457 = vmatpush.bf16.msra.mxu0 %v1448
    %1458 = vmatpush.bf16.msra.mxu0 %v1447
    %1459 = vmatpush.bf16.msra.mxu0 %v1446
    %1460 = vmatpush.bf16.msra.mxu0 %v1445
    %1461 = vmatpush.bf16.msra.mxu0 %v1444
    %1462 = vmatpush.bf16.msra.mxu0 %v1443
    %1463 = vmatpush.bf16.msra.mxu0 %v1442
    %1464 = vmatpush.bf16.msra.mxu0 %v1441
    %1465 = vmatmul.bf16.gmra.mxu0 %v1388
    %v1466 = vpop.f32.mrf.mxu0
    %v1467 = vadd.f32 %v1407, %v1466
    %v1468 = vpop.f32.mrf.mxu0
    %1469 = vdwg.mxu0
    %1470 = vst [vmem:[#allocation16] sm:$0xff] %v1467
    // Predicated region
    $region78: #{tpu_custom_call.1} parent=1 // pred_check
      _
    $region79: #{tpu_custom_call.1} parent=1 // pred_check_branch
      %1472 = sbr.rel (0) target = $region81
    $region80: #{tpu_custom_call.1} parent=1 // pred_region
      %1474 = vsyncadd [#allocation4], 0
      %s1476 = sshll.u32 [#allocation16], 4
      %s1477 = int_to_ptr.vmem [resolvable:$true] %s1476
      %s1478 = sshll.u32 %s11, 4
      %s1479 = int_to_ptr.hbm [resolvable:$true] %s1478
      %1481 = dma.vmem_to_hbm [thread:$0]  %s1477, 128, %s1479, [#allocation4]
    $region81: #{tpu_custom_call.1} parent=1 // pred_fallthru
      _
    // Predicated region
    $region82: #{tpu_custom_call.1} parent=1 // pred_check
      _
    $region83: #{tpu_custom_call.1} parent=1 // pred_check_branch
      %1483 = sbr.rel (0) target = $region85
    $region84: #{tpu_custom_call.1} parent=1 // pred_region
      %1485 = dma.done [#allocation4], 128
    $region85: #{tpu_custom_call.1} parent=1 // pred_fallthru
      _
    %1486 = vsyncpa [#allocation3], 1
    %1487 = vsyncpa [#allocation6], 1
    %1488 = vsyncpa [#allocation9], 1
    %1489 = vsyncpa [#allocation12], 1
    %1490 = vsyncpa [#allocation15], 1
    %1491 = vsyncpa [#allocation4], 1

</llo_original>
